<compile_context>
chip_gen: v7x
topology: tpu7x:2x2x1
jax: 0.10.0
libtpu: 0.0.40
codegen_flags: <defaults>
</compile_context>

<pallas_src>
import functools

import jax
import jax.numpy as jnp
from jax.experimental import pallas as pl
from jax.experimental.pallas import tpu as pltpu


_VMEM_LIMIT_BYTES = 48 * 1024 * 1024   # <= physical VMEM on v5e/v6e (128 MiB) and v7x (64 MiB)
_F32_TEMP_BYTES = 28                   # ~7 live f32 element-wise temporaries per element
_MAX_THW = 32 * 1024                   # bounds the unrolled lane fold / trace size


def _cdiv(a, b):
    return (a + b - 1) // b


def _round_up(x, m):
    return _cdiv(x, m) * m


def _pick_tiles(bc, hw, in_bytes_per_elem, mask_itemsize):
    # BC tile: multiple of 8, aligned to the packed mask tiling when possible (int8 -> 32,
    # bf16 -> 16), capped at 256 and at ~bc/2 so the "parallel" axis has >= 2 blocks for
    # v7x's two TensorCores.  Never larger than the array along the sublane dim.
    sub_align = {1: 32, 2: 16}.get(mask_itemsize, 8)
    if bc <= 8:
        tbc = bc
    else:
        tbc = min(256, (bc // 8) * 8, _round_up(_cdiv(bc, 2), 8))
        if tbc >= sub_align:
            tbc -= tbc % sub_align

    # HW tile: multiple of 128 (or the full extent when hw < 128), grown until double-buffered
    # input blocks plus in-kernel f32 temporaries reach the VMEM budget.
    if hw < 128:
        thw = hw
    else:
        budget = _VMEM_LIMIT_BYTES - 8 * 1024 * 1024
        per_elem = 2 * in_bytes_per_elem + _F32_TEMP_BYTES
        max_elems = max(budget // per_elem, 128 * tbc)
        max_thw = max(128, (max_elems // tbc) // 128 * 128)
        thw = max(128, min((hw // 128) * 128, max_thw, _MAX_THW))
    return tbc, thw


def _partial_dice_kernel(bc, hw, x_ref, f_ref, b_ref, fl_ref, bl_ref,
                         sf_acc, nf_acc, sb_acc, nb_acc):
    i = pl.program_id(0)
    j = pl.program_id(1)

    @pl.when(j == 0)
    def _init():
        sf_acc[...] = jnp.zeros_like(sf_acc)
        nf_acc[...] = jnp.zeros_like(nf_acc)
        sb_acc[...] = jnp.zeros_like(sb_acc)
        nb_acc[...] = jnp.zeros_like(nb_acc)

    x = x_ref[...].astype(jnp.float32)     # logits          (tbc, thw)
    fm = f_ref[...].astype(jnp.float32)    # foreground mask (tbc, thw)
    bm = b_ref[...].astype(jnp.float32)    # background mask (tbc, thw)
    tbc, thw = x.shape
    acc_w = sf_acc.shape[-1]

    # Stable binary_cross_entropy_with_logits (reduction='none'):
    #   target = 0 :  max(x,0)     + log1p(exp(-|x|))
    #   target = 1 :  bce_b - x
    bce_b = jnp.maximum(x, 0.0) + jnp.log1p(jnp.exp(-jnp.abs(x)))
    bce_f = bce_b - x

    f_sel = fm == 1.0
    b_sel = bm == 1.0
    if hw % thw != 0:
        # Ragged HW tail: lanes past the true extent read unspecified data; mask them out.
        col = j * thw + jax.lax.broadcasted_iota(jnp.int32, (tbc, thw), 1)
        col_ok = col < hw
        f_sel = f_sel & col_ok
        b_sel = b_sel & col_ok
        fm = jnp.where(col_ok, fm, 0.0)
        bm = jnp.where(col_ok, bm, 0.0)

    n_groups = thw // acc_w

    def lane_partials(v):
        # (tbc, thw) -> (tbc, acc_w): pairwise tree of lane-aligned static slices (VPU adds
        # only); defers the cross-lane XLU collapse to the once-per-BC-block finalize.
        parts = [v[:, g * acc_w:(g + 1) * acc_w] for g in range(n_groups)]
        while len(parts) > 1:
            nxt = [parts[g] + parts[g + 1] for g in range(0, len(parts) - 1, 2)]
            if len(parts) % 2:
                nxt.append(parts[-1])
            parts = nxt
        return parts[0]

    sf_acc[...] += lane_partials(jnp.where(f_sel, bce_f, 0.0))
    nf_acc[...] += lane_partials(fm)
    sb_acc[...] += lane_partials(jnp.where(b_sel, bce_b, 0.0))
    nb_acc[...] += lane_partials(bm)

    @pl.when(j == pl.num_programs(1) - 1)
    def _finalize():
        nf = nf_acc[...]
        nb = nb_acc[...]
        if bc % tbc != 0:
            # Ragged BC tail: rows past the true extent must not contribute.
            rid = i * tbc + jax.lax.broadcasted_iota(jnp.int32, (tbc, acc_w), 0)
            row_ok = rid < bc
            nf = jnp.where(row_ok, nf, 0.0)
            nb = jnp.where(row_ok, nb, 0.0)

        s_f = jnp.sum(sf_acc[...], axis=-1, keepdims=True)    # (tbc, 1)
        n_f = jnp.sum(nf, axis=-1, keepdims=True)
        s_b = jnp.sum(sb_acc[...], axis=-1, keepdims=True)
        n_b = jnp.sum(nb, axis=-1, keepdims=True)

        # Guarded divide: rows with zero mask-sum (and ragged-tail rows, whose n was zeroed
        # above) contribute 0, matching PyTorch where the weight is zeroed wherever mask != 1.
        ok_f = n_f > 0.0
        ok_b = n_b > 0.0
        lf = jnp.sum(jnp.where(ok_f, s_f / jnp.where(ok_f, n_f, 1.0), 0.0))
        lb = jnp.sum(jnp.where(ok_b, s_b / jnp.where(ok_b, n_b, 1.0), 0.0))

        # Lane/sublane-dense (1, 8, 128) output block (unmasked stores); the wrapper reads
        # element [i, 0, 0] of each block.
        fl_ref[...] = jnp.broadcast_to(lf, fl_ref.shape)
        bl_ref[...] = jnp.broadcast_to(lb, bl_ref.shape)


@functools.partial(jax.jit, static_argnames=("tbc", "thw"))
def partial_dice_logits_loss(prob_map, f_mask, b_mask, *, tbc=None, thw=None):
    """Returns (par_f_loss, par_b_loss).

    prob_map: logits, NCHW, any float dtype (bf16 at the interface halves its HBM read;
              compute is f32 inside the kernel).
    f_mask / b_mask: binary masks, NCHW; pass them as int8 to minimise HBM traffic.
    """
    b, c, h, w = f_mask.shape
    bc, hw = b * c, h * w

    x = prob_map.reshape(bc, hw)
    fm = f_mask.reshape(bc, hw)
    bm = b_mask.reshape(bc, hw)

    in_bytes = x.dtype.itemsize + fm.dtype.itemsize + bm.dtype.itemsize
    mask_itemsize = min(fm.dtype.itemsize, bm.dtype.itemsize)
    auto_tbc, auto_thw = _pick_tiles(bc, hw, in_bytes, mask_itemsize)
    tbc = auto_tbc if tbc is None else tbc
    thw = auto_thw if thw is None else thw

    # Width of the lane-resolved accumulators (must divide thw, or equal it when hw < 128).
    if thw % 128 != 0:
        acc_w = thw
    elif thw % 512 == 0:
        acc_w = 512
    elif thw % 256 == 0:
        acc_w = 256
    else:
        acc_w = 128

    nbc = _cdiv(bc, tbc)
    nhw = _cdiv(hw, thw)

    kernel = functools.partial(_partial_dice_kernel, bc, hw)
    in_spec = pl.BlockSpec((tbc, thw), lambda i, j: (i, j))
    out_spec = pl.BlockSpec((1, 8, 128), lambda i, j: (i, 0, 0))

    cost = pl.CostEstimate(
        flops=10 * bc * hw,
        transcendentals=2 * bc * hw,
        bytes_accessed=bc * hw * in_bytes + 2 * nbc * 8 * 128 * 4,
    )

    fl_part, bl_part = pl.pallas_call(
        kernel,
        out_shape=(
            jax.ShapeDtypeStruct((nbc, 8, 128), jnp.float32),
            jax.ShapeDtypeStruct((nbc, 8, 128), jnp.float32),
        ),
        grid_spec=pltpu.PrefetchScalarGridSpec(
            num_scalar_prefetch=0,
            grid=(nbc, nhw),
            in_specs=[in_spec, in_spec, in_spec],
            out_specs=(out_spec, out_spec),
            scratch_shapes=[pltpu.VMEM((tbc, acc_w), jnp.float32) for _ in range(4)],
        ),
        compiler_params=pltpu.CompilerParams(
            dimension_semantics=("parallel", "arbitrary"),
            vmem_limit_bytes=_VMEM_LIMIT_BYTES,
        ),
        cost_estimate=cost,
    )(x, fm, bm)

    return jnp.sum(fl_part[:, 0, 0]), jnp.sum(bl_part[:, 0, 0])


def _reference(prob_map, f_mask, b_mask):
    # Pure-JAX reference of the PyTorch forward, for validation.
    x = prob_map.astype(jnp.float32)
    f_mask = f_mask.astype(jnp.float32)
    b_mask = b_mask.astype(jnp.float32)
    log_term = jnp.log1p(jnp.exp(-jnp.abs(x)))
    relu_x = jnp.maximum(x, 0.0)
    bce_f = relu_x - x + log_term
    bce_b = relu_x + log_term

    w_f = 1.0 / jnp.sum(f_mask, axis=(-1, -2), keepdims=True)
    w_f = jnp.where(f_mask == 1.0, w_f, 0.0)
    w_b = 1.0 / jnp.sum(b_mask, axis=(-1, -2), keepdims=True)
    w_b = jnp.where(b_mask == 1.0, w_b, 0.0)
    return jnp.sum(w_f * bce_f), jnp.sum(w_b * bce_b)


if __name__ == "__main__":
    key = jax.random.PRNGKey(0)
    k1, k2, k3, k4 = jax.random.split(key, 4)

    # Test 1: module-scale shapes, int8 masks, default (single-block) tiles.
    B, C, H, W = 2, 4, 16, 16
    prob_map = jax.random.normal(k1, (B, C, H, W), dtype=jnp.float32)
    f_mask = (jax.random.uniform(k2, (B, C, H, W)) > 0.5).astype(jnp.int8)
    b_mask = (1 - f_mask).astype(jnp.int8)

    fl, bl = partial_dice_logits_loss(prob_map, f_mask, b_mask)
    fl, bl = jax.block_until_ready((fl, bl))
    rf, rb = _reference(prob_map, f_mask, b_mask)
    assert jnp.allclose(fl, rf, rtol=1e-4, atol=1e-4), (fl, rf)
    assert jnp.allclose(bl, rb, rtol=1e-4, atol=1e-4), (bl, rb)

    # Test 2: non-divisible bc/hw with a multi-tile grid and f32 masks — exercises the
    # ragged-tail masking, the accumulator carry across HW tiles, and the nbc > 1 output path.
    B2, C2, H2, W2 = 3, 5, 24, 40      # bc = 15, hw = 960
    pm2 = jax.random.normal(k3, (B2, C2, H2, W2), dtype=jnp.float32)
    fm2 = (jax.random.uniform(k4, (B2, C2, H2, W2)) > 0.4).astype(jnp.float32)
    bm2 = 1.0 - fm2

    fl2, bl2 = partial_dice_logits_loss(pm2, fm2, bm2, tbc=8, thw=256)
    fl2, bl2 = jax.block_until_ready((fl2, bl2))
    rf2, rb2 = _reference(pm2, fm2, bm2)
    assert jnp.allclose(fl2, rf2, rtol=1e-4, atol=1e-4), (fl2, rf2)
    assert jnp.allclose(bl2, rb2, rtol=1e-4, atol=1e-4), (bl2, rb2)

    print("KERNEL_OK")
</pallas_src>

<mosaic_0001>
module attributes {stable_mosaic.version = 11 : i64} {
  func.func @_partial_dice_kernel(%arg0: i32, %arg1: i32, %arg2: memref<8x256xf32, #tpu.memory_space<vmem>>, %arg3: memref<8x256xi8, #tpu.memory_space<vmem>>, %arg4: memref<8x256xi8, #tpu.memory_space<vmem>>, %arg5: memref<1x8x128xf32, #tpu.memory_space<vmem>>, %arg6: memref<1x8x128xf32, #tpu.memory_space<vmem>>, %arg7: memref<8x256xf32, #tpu.memory_space<vmem>>, %arg8: memref<8x256xf32, #tpu.memory_space<vmem>>, %arg9: memref<8x256xf32, #tpu.memory_space<vmem>>, %arg10: memref<8x256xf32, #tpu.memory_space<vmem>>) attributes {dimension_semantics = [#tpu.dimension_semantics<parallel>, #tpu.dimension_semantics<arbitrary>], iteration_bounds = array<i64: 1, 1>, scalar_prefetch = 0 : i64, scratch_operands = 4 : i64, tpu.core_type = #tpu.core_type<tc>, window_params = [{transform_indices = @transform_0, window_bounds = array<i64: 8, 256>}, {transform_indices = @transform_1, window_bounds = array<i64: 8, 256>}, {transform_indices = @transform_2, window_bounds = array<i64: 8, 256>}, {transform_indices = @transform_3, window_bounds = array<i64: 1, 8, 128>}, {transform_indices = @transform_4, window_bounds = array<i64: 1, 8, 128>}]} {
    %c0_i32 = arith.constant 0 : i32
    %0 = arith.cmpi eq, %arg1, %c0_i32 : i32
    %1 = arith.extui %0 : i1 to i32
    %c0_i32_0 = arith.constant 0 : i32
    %2 = arith.cmpi ne, %1, %c0_i32_0 : i32
    scf.if %2 {
      %cst_29 = arith.constant 0.000000e+00 : f32
      %40 = vector.broadcast %cst_29 : f32 to vector<8x256xf32>
      %c0_30 = arith.constant 0 : index
      %c0_31 = arith.constant 0 : index
      %41 = vector.load %arg7[%c0_30, %c0_31] : memref<8x256xf32, #tpu.memory_space<vmem>>, vector<8x256xf32>
      tpu.vector_store %arg7[%c0_30, %c0_31], %40 {strides = array<i32>} : memref<8x256xf32, #tpu.memory_space<vmem>>, vector<8x256xf32>,
      %cst_32 = arith.constant 0.000000e+00 : f32
      %42 = vector.broadcast %cst_32 : f32 to vector<8x256xf32>
      %c0_33 = arith.constant 0 : index
      %c0_34 = arith.constant 0 : index
      %43 = vector.load %arg8[%c0_33, %c0_34] : memref<8x256xf32, #tpu.memory_space<vmem>>, vector<8x256xf32>
      tpu.vector_store %arg8[%c0_33, %c0_34], %42 {strides = array<i32>} : memref<8x256xf32, #tpu.memory_space<vmem>>, vector<8x256xf32>,
      %cst_35 = arith.constant 0.000000e+00 : f32
      %44 = vector.broadcast %cst_35 : f32 to vector<8x256xf32>
      %c0_36 = arith.constant 0 : index
      %c0_37 = arith.constant 0 : index
      %45 = vector.load %arg9[%c0_36, %c0_37] : memref<8x256xf32, #tpu.memory_space<vmem>>, vector<8x256xf32>
      tpu.vector_store %arg9[%c0_36, %c0_37], %44 {strides = array<i32>} : memref<8x256xf32, #tpu.memory_space<vmem>>, vector<8x256xf32>,
      %cst_38 = arith.constant 0.000000e+00 : f32
      %46 = vector.broadcast %cst_38 : f32 to vector<8x256xf32>
      %c0_39 = arith.constant 0 : index
      %c0_40 = arith.constant 0 : index
      %47 = vector.load %arg10[%c0_39, %c0_40] : memref<8x256xf32, #tpu.memory_space<vmem>>, vector<8x256xf32>
      tpu.vector_store %arg10[%c0_39, %c0_40], %46 {strides = array<i32>} : memref<8x256xf32, #tpu.memory_space<vmem>>, vector<8x256xf32>,
    } else {
    }
    %c0 = arith.constant 0 : index
    %c0_1 = arith.constant 0 : index
    %3 = vector.load %arg2[%c0, %c0_1] : memref<8x256xf32, #tpu.memory_space<vmem>>, vector<8x256xf32>
    %c0_2 = arith.constant 0 : index
    %c0_3 = arith.constant 0 : index
    %4 = vector.load %arg3[%c0_2, %c0_3] : memref<8x256xi8, #tpu.memory_space<vmem>>, vector<8x256xi8>
    %5 = arith.sitofp %4 : vector<8x256xi8> to vector<8x256xf32>
    %c0_4 = arith.constant 0 : index
    %c0_5 = arith.constant 0 : index
    %6 = vector.load %arg4[%c0_4, %c0_5] : memref<8x256xi8, #tpu.memory_space<vmem>>, vector<8x256xi8>
    %7 = arith.sitofp %6 : vector<8x256xi8> to vector<8x256xf32>
    %cst = arith.constant 0.000000e+00 : f32
    %8 = vector.broadcast %cst : f32 to vector<8x256xf32>
    %9 = arith.maximumf %3, %8 : vector<8x256xf32>
    %10 = math.absf %3 : vector<8x256xf32>
    %cst_6 = arith.constant 0.000000e+00 : f32
    %11 = vector.broadcast %cst_6 : f32 to vector<8x256xf32>
    %12 = arith.subf %11, %10 : vector<8x256xf32>
    %13 = math.exp %12 : vector<8x256xf32>
    %14 = math.log1p %13 : vector<8x256xf32>
    %15 = arith.addf %9, %14 : vector<8x256xf32>
    %16 = arith.subf %15, %3 : vector<8x256xf32>
    %cst_7 = arith.constant 1.000000e+00 : f32
    %17 = vector.broadcast %cst_7 : f32 to vector<8x256xf32>
    %18 = arith.cmpf oeq, %5, %17 : vector<8x256xf32>
    %cst_8 = arith.constant 1.000000e+00 : f32
    %19 = vector.broadcast %cst_8 : f32 to vector<8x256xf32>
    %20 = arith.cmpf oeq, %7, %19 : vector<8x256xf32>
    %c0_9 = arith.constant 0 : index
    %c0_10 = arith.constant 0 : index
    %21 = vector.load %arg7[%c0_9, %c0_10] : memref<8x256xf32, #tpu.memory_space<vmem>>, vector<8x256xf32>
    %cst_11 = arith.constant 0.000000e+00 : f32
    %22 = vector.broadcast %cst_11 : f32 to vector<8x256xf32>
    %23 = arith.select %18, %16, %22 : vector<8x256xi1>, vector<8x256xf32>
    %24 = arith.addf %21, %23 : vector<8x256xf32>
    %c0_12 = arith.constant 0 : index
    %c0_13 = arith.constant 0 : index
    %25 = vector.load %arg7[%c0_12, %c0_13] : memref<8x256xf32, #tpu.memory_space<vmem>>, vector<8x256xf32>
    tpu.vector_store %arg7[%c0_12, %c0_13], %24 {strides = array<i32>} : memref<8x256xf32, #tpu.memory_space<vmem>>, vector<8x256xf32>,
    %c0_14 = arith.constant 0 : index
    %c0_15 = arith.constant 0 : index
    %26 = vector.load %arg8[%c0_14, %c0_15] : memref<8x256xf32, #tpu.memory_space<vmem>>, vector<8x256xf32>
    %27 = arith.addf %26, %5 : vector<8x256xf32>
    %c0_16 = arith.constant 0 : index
    %c0_17 = arith.constant 0 : index
    %28 = vector.load %arg8[%c0_16, %c0_17] : memref<8x256xf32, #tpu.memory_space<vmem>>, vector<8x256xf32>
    tpu.vector_store %arg8[%c0_16, %c0_17], %27 {strides = array<i32>} : memref<8x256xf32, #tpu.memory_space<vmem>>, vector<8x256xf32>,
    %c0_18 = arith.constant 0 : index
    %c0_19 = arith.constant 0 : index
    %29 = vector.load %arg9[%c0_18, %c0_19] : memref<8x256xf32, #tpu.memory_space<vmem>>, vector<8x256xf32>
    %cst_20 = arith.constant 0.000000e+00 : f32
    %30 = vector.broadcast %cst_20 : f32 to vector<8x256xf32>
    %31 = arith.select %20, %15, %30 : vector<8x256xi1>, vector<8x256xf32>
    %32 = arith.addf %29, %31 : vector<8x256xf32>
    %c0_21 = arith.constant 0 : index
    %c0_22 = arith.constant 0 : index
    %33 = vector.load %arg9[%c0_21, %c0_22] : memref<8x256xf32, #tpu.memory_space<vmem>>, vector<8x256xf32>
    tpu.vector_store %arg9[%c0_21, %c0_22], %32 {strides = array<i32>} : memref<8x256xf32, #tpu.memory_space<vmem>>, vector<8x256xf32>,
    %c0_23 = arith.constant 0 : index
    %c0_24 = arith.constant 0 : index
    %34 = vector.load %arg10[%c0_23, %c0_24] : memref<8x256xf32, #tpu.memory_space<vmem>>, vector<8x256xf32>
    %35 = arith.addf %34, %7 : vector<8x256xf32>
    %c0_25 = arith.constant 0 : index
    %c0_26 = arith.constant 0 : index
    %36 = vector.load %arg10[%c0_25, %c0_26] : memref<8x256xf32, #tpu.memory_space<vmem>>, vector<8x256xf32>
    tpu.vector_store %arg10[%c0_25, %c0_26], %35 {strides = array<i32>} : memref<8x256xf32, #tpu.memory_space<vmem>>, vector<8x256xf32>,
    %c0_i32_27 = arith.constant 0 : i32
    %37 = arith.cmpi eq, %arg1, %c0_i32_27 : i32
    %38 = arith.extui %37 : i1 to i32
    %c0_i32_28 = arith.constant 0 : i32
    %39 = arith.cmpi ne, %38, %c0_i32_28 : i32
    scf.if %39 {
      %c0_29 = arith.constant 0 : index
      %c0_30 = arith.constant 0 : index
      %40 = vector.load %arg8[%c0_29, %c0_30] : memref<8x256xf32, #tpu.memory_space<vmem>>, vector<8x256xf32>
      %c0_31 = arith.constant 0 : index
      %c0_32 = arith.constant 0 : index
      %41 = vector.load %arg10[%c0_31, %c0_32] : memref<8x256xf32, #tpu.memory_space<vmem>>, vector<8x256xf32>
      %c0_33 = arith.constant 0 : index
      %c0_34 = arith.constant 0 : index
      %42 = vector.load %arg7[%c0_33, %c0_34] : memref<8x256xf32, #tpu.memory_space<vmem>>, vector<8x256xf32>
      %cst_35 = arith.constant dense<0.000000e+00> : vector<8xf32>
      %43 = vector.multi_reduction <add>, %42, %cst_35 [1] : vector<8x256xf32> to vector<8xf32>
      %44 = vector.shape_cast %43 : vector<8xf32> to vector<8x1xf32>
      %cst_36 = arith.constant dense<0.000000e+00> : vector<8xf32>
      %45 = vector.multi_reduction <add>, %40, %cst_36 [1] : vector<8x256xf32> to vector<8xf32>
      %46 = vector.shape_cast %45 : vector<8xf32> to vector<8x1xf32>
      %c0_37 = arith.constant 0 : index
      %c0_38 = arith.constant 0 : index
      %47 = vector.load %arg9[%c0_37, %c0_38] : memref<8x256xf32, #tpu.memory_space<vmem>>, vector<8x256xf32>
      %cst_39 = arith.constant dense<0.000000e+00> : vector<8xf32>
      %48 = vector.multi_reduction <add>, %47, %cst_39 [1] : vector<8x256xf32> to vector<8xf32>
      %49 = vector.shape_cast %48 : vector<8xf32> to vector<8x1xf32>
      %cst_40 = arith.constant dense<0.000000e+00> : vector<8xf32>
      %50 = vector.multi_reduction <add>, %41, %cst_40 [1] : vector<8x256xf32> to vector<8xf32>
      %51 = vector.shape_cast %50 : vector<8xf32> to vector<8x1xf32>
      %cst_41 = arith.constant 0.000000e+00 : f32
      %52 = vector.broadcast %cst_41 : f32 to vector<8x1xf32>
      %53 = arith.cmpf ogt, %46, %52 : vector<8x1xf32>
      %cst_42 = arith.constant 0.000000e+00 : f32
      %54 = vector.broadcast %cst_42 : f32 to vector<8x1xf32>
      %55 = arith.cmpf ogt, %51, %54 : vector<8x1xf32>
      %cst_43 = arith.constant 1.000000e+00 : f32
      %56 = vector.broadcast %cst_43 : f32 to vector<8x1xf32>
      %57 = arith.select %53, %46, %56 : vector<8x1xi1>, vector<8x1xf32>
      %58 = arith.divf %44, %57 : vector<8x1xf32>
      %cst_44 = arith.constant 0.000000e+00 : f32
      %59 = vector.broadcast %cst_44 : f32 to vector<8x1xf32>
      %60 = arith.select %53, %58, %59 : vector<8x1xi1>, vector<8x1xf32>
      %61 = vector.shape_cast %60 : vector<8x1xf32> to vector<1x8x1xf32>
      %cst_45 = arith.constant dense<0.000000e+00> : vector<1xf32>
      %62 = vector.multi_reduction <add>, %61, %cst_45 [1, 2] : vector<1x8x1xf32> to vector<1xf32>
      %63 = vector.shape_cast %62 : vector<1xf32> to vector<1x1x1xf32>
      %64 = vector.extract %63[0, 0, 0] : f32 from vector<1x1x1xf32>
      %cst_46 = arith.constant 1.000000e+00 : f32
      %65 = vector.broadcast %cst_46 : f32 to vector<8x1xf32>
      %66 = arith.select %55, %51, %65 : vector<8x1xi1>, vector<8x1xf32>
      %67 = arith.divf %49, %66 : vector<8x1xf32>
      %cst_47 = arith.constant 0.000000e+00 : f32
      %68 = vector.broadcast %cst_47 : f32 to vector<8x1xf32>
      %69 = arith.select %55, %67, %68 : vector<8x1xi1>, vector<8x1xf32>
      %70 = vector.shape_cast %69 : vector<8x1xf32> to vector<1x8x1xf32>
      %cst_48 = arith.constant dense<0.000000e+00> : vector<1xf32>
      %71 = vector.multi_reduction <add>, %70, %cst_48 [1, 2] : vector<1x8x1xf32> to vector<1xf32>
      %72 = vector.shape_cast %71 : vector<1xf32> to vector<1x1x1xf32>
      %73 = vector.extract %72[0, 0, 0] : f32 from vector<1x1x1xf32>
      %74 = vector.broadcast %64 : f32 to vector<1x8x128xf32>
      %c0_49 = arith.constant 0 : index
      %c0_50 = arith.constant 0 : index
      %c0_51 = arith.constant 0 : index
      %75 = vector.load %arg5[%c0_49, %c0_50, %c0_51] : memref<1x8x128xf32, #tpu.memory_space<vmem>>, vector<1x8x128xf32>
      tpu.vector_store %arg5[%c0_49, %c0_50, %c0_51], %74 {strides = array<i32>} : memref<1x8x128xf32, #tpu.memory_space<vmem>>, vector<1x8x128xf32>,
      %76 = vector.broadcast %73 : f32 to vector<1x8x128xf32>
      %c0_52 = arith.constant 0 : index
      %c0_53 = arith.constant 0 : index
      %c0_54 = arith.constant 0 : index
      %77 = vector.load %arg6[%c0_52, %c0_53, %c0_54] : memref<1x8x128xf32, #tpu.memory_space<vmem>>, vector<1x8x128xf32>
      tpu.vector_store %arg6[%c0_52, %c0_53, %c0_54], %76 {strides = array<i32>} : memref<1x8x128xf32, #tpu.memory_space<vmem>>, vector<1x8x128xf32>,
    } else {
    }
    return
  }
  func.func @transform_0(%arg0: i32, %arg1: i32) -> (i32, i32) {
    %c0_i32 = arith.constant 0 : i32
    return %arg0, %arg1 : i32, i32
  }
  func.func @transform_1(%arg0: i32, %arg1: i32) -> (i32, i32) {
    %c0_i32 = arith.constant 0 : i32
    return %arg0, %arg1 : i32, i32
  }
  func.func @transform_2(%arg0: i32, %arg1: i32) -> (i32, i32) {
    %c0_i32 = arith.constant 0 : i32
    return %arg0, %arg1 : i32, i32
  }
  func.func @transform_3(%arg0: i32, %arg1: i32) -> (i32, i32, i32) {
    %c0_i32 = arith.constant 0 : i32
    %c0_i32_0 = arith.constant 0 : i32
    %c0_i32_1 = arith.constant 0 : i32
    return %arg0, %c0_i32, %c0_i32_0 : i32, i32, i32
  }
  func.func @transform_4(%arg0: i32, %arg1: i32) -> (i32, i32, i32) {
    %c0_i32 = arith.constant 0 : i32
    %c0_i32_0 = arith.constant 0 : i32
    %c0_i32_1 = arith.constant 0 : i32
    return %arg0, %c0_i32, %c0_i32_0 : i32, i32, i32
  }
}

</mosaic_0001>

<llo_original>
// kernel: partial_dice_logits_loss.1
$region0: #{partial_dice_logits_loss.1}
  #allocation0 [shape = 'u32[]', space=smem, size = 0x4, offset = 0x4, fixed_abs, tag = 'smem constant byte address 0x4 - core index']
  #allocation1 [shape = 'u32[144,128]{1,0:T(1,128)}', space=vmem, size = 0x12000, scoped, tag = 'internal scratch']
  #allocation2 [shape = 'f32[8,256]{1,0:T(8,128)}', space=vmem, size = 0x2000, scoped, tag = 'scratch operand']
  #allocation3 [shape = 'f32[8,256]{1,0:T(8,128)}', space=vmem, size = 0x2000, scoped, tag = 'scratch operand']
  #allocation4 [shape = 'f32[8,256]{1,0:T(8,128)}', space=vmem, size = 0x2000, scoped, tag = 'scratch operand']
  #allocation5 [shape = 'f32[8,256]{1,0:T(8,128)}', space=vmem, size = 0x2000, scoped, tag = 'scratch operand']
  %s0 = inlined_call_operand.vmem [shape: f32[8,256], index: 0, kind: input, shape index: {}]
  %s1 = inlined_call_operand.vmem [shape: s8[8,256], index: 1, kind: input, shape index: {}]
  %s2 = inlined_call_operand.vmem [shape: s8[8,256], index: 2, kind: input, shape index: {}]
  %s3 = inlined_call_operand.vmem [shape: f32[1,8,128], index: 3, kind: output, shape index: {0}]
  %s4 = inlined_call_operand.vmem [shape: f32[1,8,128], index: 4, kind: output, shape index: {1}]
  %5 = xla_tuple %s3, %s4
  %s6 = sld [smem:[#allocation0]]
  $region38: #{partial_dice_logits_loss.1} parent=0
    _
  %s8 = ssub.s32 1, %s6
  %s9 = scalar_select 0, %s8, %s6
  // Predicated region
  $region2: #{partial_dice_logits_loss.1} parent=0 // pred_check
    _
  $region3: #{partial_dice_logits_loss.1} parent=0 // pred_check_branch
    %11 = sbr.rel (0) target = $region5
  $region4: #{partial_dice_logits_loss.1} parent=0 // pred_region
    _
  $region5: #{partial_dice_logits_loss.1} parent=0 // pred_fallthru
    _
  // Predicated region
  $region6: #{partial_dice_logits_loss.1} parent=0 // pred_check
    _
  $region7: #{partial_dice_logits_loss.1} parent=0 // pred_check_branch
    %13 = sbr.rel (0) target = $region9
  $region8: #{partial_dice_logits_loss.1} parent=0 // pred_region
    _
  $region9: #{partial_dice_logits_loss.1} parent=0 // pred_fallthru
    _
  // Predicated region
  $region10: #{partial_dice_logits_loss.1} parent=0 // pred_check
    _
  $region11: #{partial_dice_logits_loss.1} parent=0 // pred_check_branch
    %15 = sbr.rel (0) target = $region13
  $region12: #{partial_dice_logits_loss.1} parent=0 // pred_region
    _
  $region13: #{partial_dice_logits_loss.1} parent=0 // pred_fallthru
    _
  %p16 = scmp.eq.s32.totalorder 0, 0
  // Predicated region
  $region14: #{partial_dice_logits_loss.1} parent=0 // pred_check
    %p17 = pneg %p16
  $region15: #{partial_dice_logits_loss.1} parent=0 // pred_check_branch
    %19 = sbr.rel (%p17) target = $region17
  $region16: #{partial_dice_logits_loss.1} parent=0 // pred_region
    %20 = vst [vmem:[#allocation2] sm:$0xff] 0.0
    %21 = vst [vmem:[#allocation2 + $0x8] sm:$0xff] 0.0
    %22 = vst [vmem:[#allocation3] sm:$0xff] 0.0
    %23 = vst [vmem:[#allocation3 + $0x8] sm:$0xff] 0.0
    %24 = vst [vmem:[#allocation4] sm:$0xff] 0.0
    %25 = vst [vmem:[#allocation4 + $0x8] sm:$0xff] 0.0
    %26 = vst [vmem:[#allocation5] sm:$0xff] 0.0
    %27 = vst [vmem:[#allocation5 + $0x8] sm:$0xff] 0.0
  $region17: #{partial_dice_logits_loss.1} parent=0 // pred_fallthru
    _
  %v28 = vld [vmem:[%s0] sm:$0xff]
  %v29 = vld [vmem:[%s0 + $0x8] sm:$0xff]
  %v30 = vld [vmem:[%s1] sm:$0xf]
  %v31 = vunpack.c.0.s8 %v30
  %v32 = vunpack.c.1.s8 %v30
  %v33 = vcvt.s32.f32 %v31
  %v34 = vcvt.s32.f32 %v32
  %v35 = vld [vmem:[%s2] sm:$0xf]
  %v36 = vunpack.c.0.s8 %v35
  %v37 = vunpack.c.1.s8 %v35
  %v38 = vcvt.s32.f32 %v36
  %v39 = vcvt.s32.f32 %v37
  %v40 = vmax.f32 %v28, 0.0
  %v41 = vmax.f32 %v29, 0.0
  %v42 = vand.u32 2147483647, %v28
  %v43 = vand.u32 2147483647, %v29
  %v44 = vsub.f32 0.0, %v42
  %v45 = vsub.f32 0.0, %v43
  %v46 = vmul.f32 %v44, 1.442695
  %v47 = vpow.pop %v46
  %v48 = vmul.f32 %v45, 1.442695
  %v49 = vpow.pop %v48
  %v50 = vadd.f32 %v47, 1.0
  %v51 = vlog2.pop %v50
  %v52 = vmul.f32 %v51, 0.6931472
  %v53 = vmul.f32 -0.5, %v47
  %v54 = vadd.f32 %v53, 1.0
  %v55 = vmul.f32 %v54, %v47
  %v56 = vand.u32 2147483647, %v47
  %vm57 = vcmp.lt.f32.partialorder %v56, 0.0004427343
  %v58 = vsel %vm57, %v55, %v52
  %v59 = vadd.f32 %v49, 1.0
  %v60 = vlog2.pop %v59
  %v61 = vmul.f32 %v60, 0.6931472
  %v62 = vmul.f32 -0.5, %v49
  %v63 = vadd.f32 %v62, 1.0
  %v64 = vmul.f32 %v63, %v49
  %v65 = vand.u32 2147483647, %v49
  %vm66 = vcmp.lt.f32.partialorder %v65, 0.0004427343
  %v67 = vsel %vm66, %v64, %v61
  %v68 = vadd.f32 %v40, %v58
  %v69 = vadd.f32 %v41, %v67
  %v70 = vsub.f32 %v68, %v28
  %v71 = vsub.f32 %v69, %v29
  %vm72 = vcmp.eq.f32.partialorder %v33, 1.0
  %vm73 = vcmp.eq.f32.partialorder %v34, 1.0
  %vm74 = vcmp.eq.f32.partialorder %v38, 1.0
  %vm75 = vcmp.eq.f32.partialorder %v39, 1.0
  %v76 = vld [vmem:[#allocation2] sm:$0xff]
  %v77 = vld [vmem:[#allocation2 + $0x8] sm:$0xff]
  %v78 = vsel %vm72, %v70, 0.0
  %v79 = vsel %vm73, %v71, 0.0
  %v80 = vadd.f32 %v76, %v78
  %v81 = vadd.f32 %v77, %v79
  %82 = vst [vmem:[#allocation2] sm:$0xff] %v80
  %83 = vst [vmem:[#allocation2 + $0x8] sm:$0xff] %v81
  %v84 = vld [vmem:[#allocation3] sm:$0xff]
  %v85 = vld [vmem:[#allocation3 + $0x8] sm:$0xff]
  %v86 = vadd.f32 %v84, %v33
  %v87 = vadd.f32 %v85, %v34
  %88 = vst [vmem:[#allocation3] sm:$0xff] %v86
  %89 = vst [vmem:[#allocation3 + $0x8] sm:$0xff] %v87
  %v90 = vld [vmem:[#allocation4] sm:$0xff]
  %v91 = vld [vmem:[#allocation4 + $0x8] sm:$0xff]
  %v92 = vsel %vm74, %v68, 0.0
  %v93 = vsel %vm75, %v69, 0.0
  %v94 = vadd.f32 %v90, %v92
  %v95 = vadd.f32 %v91, %v93
  %96 = vst [vmem:[#allocation4] sm:$0xff] %v94
  %97 = vst [vmem:[#allocation4 + $0x8] sm:$0xff] %v95
  %v98 = vld [vmem:[#allocation5] sm:$0xff]
  %v99 = vld [vmem:[#allocation5 + $0x8] sm:$0xff]
  %v100 = vadd.f32 %v98, %v38
  %v101 = vadd.f32 %v99, %v39
  %102 = vst [vmem:[#allocation5] sm:$0xff] %v100
  %103 = vst [vmem:[#allocation5 + $0x8] sm:$0xff] %v101
  // Predicated region
  $region18: #{partial_dice_logits_loss.1} parent=0 // pred_check
    %p104 = pneg %p16
  $region19: #{partial_dice_logits_loss.1} parent=0 // pred_check_branch
    %106 = sbr.rel (%p104) target = $region21
  $region20: #{partial_dice_logits_loss.1} parent=0 // pred_region
    %v107 = vld [vmem:[#allocation3] sm:$0xff]
    %v108 = vld [vmem:[#allocation3 + $0x8] sm:$0xff]
    %v109 = vld [vmem:[#allocation5] sm:$0xff]
    %v110 = vld [vmem:[#allocation5 + $0x8] sm:$0xff]
    %v111 = vld [vmem:[#allocation2] sm:$0xff]
    %v112 = vld [vmem:[#allocation2 + $0x8] sm:$0xff]
    %v113 = vadd.f32 %v111, %v112
    %114 = vadd.xlane.f32.xlu0 %v113
    %v115 = vpop.xlane.xlu0 %114
    %v116 = vadd.f32 %v107, %v108
    %117 = vadd.xlane.f32.xlu0 %v116
    %v118 = vpop.xlane.xlu0 %117
    %v119 = vld [vmem:[#allocation4] sm:$0xff]
    %v120 = vld [vmem:[#allocation4 + $0x8] sm:$0xff]
    %v121 = vadd.f32 %v119, %v120
    %122 = vadd.xlane.f32.xlu0 %v121
    %v123 = vpop.xlane.xlu0 %122
    %v124 = vadd.f32 %v109, %v110
    %125 = vadd.xlane.f32.xlu0 %v124
    %v126 = vpop.xlane.xlu0 %125
    %vm127 = vcmp.gt.f32.partialorder %v118, 0.0
    %vm128 = vcmp.gt.f32.partialorder %v126, 0.0
    %v129 = vsel %vm127, %v118, 1.0
    %v130 = vrcp.pop %v129
    %v131 = vmul.f32 %v115, %v130
    %v132 = vsel %vm127, %v131, 0.0
    %vm133 = vcmask 7168
    %v134 = vsel %vm133, %v132, 0.0
    %135 = vadd.xlane.f32.xlu0 %v134
    %v136 = vpop.xlane.xlu0 %135
    %v137 = vrot.slane %v136, 4
    %v138 = vadd.f32 %v136, %v137
    %v139 = vrot.slane %v138, 2
    %v140 = vadd.f32 %v138, %v139
    %v141 = vrot.slane %v140, 1
    %v142 = vadd.f32 %v140, %v141
    %s143 = vtos %v142
    %v144 = vsel %vm128, %v126, 1.0
    %v145 = vrcp.pop %v144
    %v146 = vmul.f32 %v123, %v145
    %v147 = vsel %vm128, %v146, 0.0
    %v148 = vsel %vm133, %v147, 0.0
    %149 = vadd.xlane.f32.xlu0 %v148
    %v150 = vpop.xlane.xlu0 %149
    %v151 = vrot.slane %v150, 4
    %v152 = vadd.f32 %v150, %v151
    %v153 = vrot.slane %v152, 2
    %v154 = vadd.f32 %v152, %v153
    %v155 = vrot.slane %v154, 1
    %v156 = vadd.f32 %v154, %v155
    %s157 = vtos %v156
    %v158 = vstv %s143
    %159 = vst [vmem:[%s3] sm:$0xff] %v158
    %v160 = vstv %s157
    %161 = vst [vmem:[%s4] sm:$0xff] %v160
  $region21: #{partial_dice_logits_loss.1} parent=0 // pred_fallthru
    _
  // Predicated region
  $region22: #{partial_dice_logits_loss.1} parent=0 // pred_check
    _
  $region23: #{partial_dice_logits_loss.1} parent=0 // pred_check_branch
    %163 = sbr.rel (0) target = $region25
  $region24: #{partial_dice_logits_loss.1} parent=0 // pred_region
    _
  $region25: #{partial_dice_logits_loss.1} parent=0 // pred_fallthru
    _
  // Predicated region
  $region26: #{partial_dice_logits_loss.1} parent=0 // pred_check
    _
  $region27: #{partial_dice_logits_loss.1} parent=0 // pred_check_branch
    %165 = sbr.rel (0) target = $region29
  $region28: #{partial_dice_logits_loss.1} parent=0 // pred_region
    _
  $region29: #{partial_dice_logits_loss.1} parent=0 // pred_fallthru
    _
  // Predicated region
  $region30: #{partial_dice_logits_loss.1} parent=0 // pred_check
    _
  $region31: #{partial_dice_logits_loss.1} parent=0 // pred_check_branch
    %167 = sbr.rel (0) target = $region33
  $region32: #{partial_dice_logits_loss.1} parent=0 // pred_region
    _
  $region33: #{partial_dice_logits_loss.1} parent=0 // pred_fallthru
    _
  // Predicated region
  $region34: #{partial_dice_logits_loss.1} parent=0 // pred_check
    _
  $region35: #{partial_dice_logits_loss.1} parent=0 // pred_check_branch
    %169 = sbr.rel (0) target = $region37
  $region36: #{partial_dice_logits_loss.1} parent=0 // pred_region
    _
  $region37: #{partial_dice_logits_loss.1} parent=0 // pred_fallthru
    _

</llo_original>
